<compile_context>
chip_gen: v5e
topology: v5e:2x2
jax: 0.10.0
libtpu: 0.0.40
codegen_flags: <defaults>
</compile_context>

<pallas_src>
import math

import jax
import jax.numpy as jnp
from jax.experimental import pallas as pl
from jax.experimental.pallas import tpu as pltpu

LANE = 128
ROW_ALIGN = 16        # sublane multiple valid for both f32 (8) and bf16 (16)
TILE_B_SINGLE = 512   # up to this many rows -> single grid step
TILE_B_MAX = 1024     # max rows per tile when splitting into multiple steps


def _round_up(a, m):
    return (a + m - 1) // m * m


def _cdiv(a, m):
    return (a + m - 1) // m


def _pad2(a, rows, cols):
    r, c = a.shape
    return jnp.pad(a, ((0, rows - r), (0, cols - c)))


def prepare_params(params):
    """One-time packing of the module parameters for the kernel.

    params = (wl, bl, w1, b1, w2, b2, w3, b3); weights stored [in, out],
    biases [1, out].  Layer-1 weight is fused with the linear-skip weight as
    [w1 | zero-pad to 128 lanes | wl] so both in-kernel slices are lane
    aligned.  Weights are cast to bf16 (MXU operands), biases stay f32.
    """
    wl, bl, w1, b1, w2, b2, w3, b3 = params
    n_in, n_out = wl.shape
    n_hidden = w1.shape[1]
    n_h_pad = _round_up(n_hidden, LANE)

    w_first = jnp.concatenate(
        [_pad2(w1.astype(jnp.float32), n_in, n_h_pad),
         wl.astype(jnp.float32)], axis=1).astype(jnp.bfloat16)
    b_first = jnp.concatenate(
        [_pad2(b1.astype(jnp.float32), 1, n_h_pad),
         bl.astype(jnp.float32)], axis=1)

    return {
        "w_first": w_first,                     # (n_in, n_h_pad + n_out) bf16
        "b_first": b_first,                     # (1, n_h_pad + n_out)   f32
        "w2": w2.astype(jnp.bfloat16),          # (n_hidden, n_hidden)   bf16
        "b2": b2.astype(jnp.float32),           # (1, n_hidden)          f32
        "w3": w3.astype(jnp.bfloat16),          # (n_hidden, n_out)      bf16
        "b3": b3.astype(jnp.float32),           # (1, n_out)             f32
        "n_in": n_in, "n_out": n_out,
        "n_hidden": n_hidden, "n_h_pad": n_h_pad,
    }


def _make_kernel(n_hidden, n_h_pad):
    def kernel(xu_ref, wf_ref, bf_ref, w2_ref, b2_ref, w3_ref, b3_ref, o_ref):
        # Fused first matmul (bf16 operands, f32 accumulation):
        #   cols [0:n_hidden)  -> first hidden-layer pre-activation
        #   cols [n_h_pad:)    -> linear skip path (lane-aligned slice)
        y = jnp.dot(xu_ref[...], wf_ref[...],
                    preferred_element_type=jnp.float32) + bf_ref[...]
        h = jnp.tanh(y[:, :n_hidden])
        lin = y[:, n_h_pad:]
        h = jnp.tanh(jnp.dot(h.astype(jnp.bfloat16), w2_ref[...],
                             preferred_element_type=jnp.float32) + b2_ref[...])
        nl = jnp.dot(h.astype(jnp.bfloat16), w3_ref[...],
                     preferred_element_type=jnp.float32) + b3_ref[...]
        o_ref[...] = (lin + nl).astype(o_ref.dtype)
    return kernel


def default_output_net_pallas(x, prepared, ny, u=None):
    """Forward of default_output_net: y = net_lin(xu) + ffnn(xu), xu=[x,u_flat]."""
    B = x.shape[0]
    ny = tuple(ny)
    n_in, n_out = prepared["n_in"], prepared["n_out"]
    n_hidden, n_h_pad = prepared["n_hidden"], prepared["n_h_pad"]

    if u is not None:
        xu = jnp.concatenate([x, u.reshape(B, -1)], axis=1)
    else:
        xu = x
    assert xu.shape[1] == n_in, "param / input shape mismatch"
    xu = xu.astype(jnp.bfloat16)

    # --- batch tiling: one step for small B, else an even, balanced tile count
    if B <= TILE_B_SINGLE:
        num_tiles = 1
        tile_b = _round_up(B, ROW_ALIGN)
    else:
        num_tiles = 2 * _cdiv(B, 2 * TILE_B_MAX)           # even -> v7x 2 TCs
        tile_b = _round_up(_cdiv(B, num_tiles), ROW_ALIGN)  # balanced tiles
    Bp = tile_b * num_tiles
    if Bp != B:
        xu = jnp.pad(xu, ((0, Bp - B), (0, 0)))

    weights = (prepared["w_first"], prepared["b_first"], prepared["w2"],
               prepared["b2"], prepared["w3"], prepared["b3"])
    # Constant-index blocks -> weights stay resident in VMEM across grid steps.
    w_specs = [pl.BlockSpec(w.shape, lambda i: (0, 0)) for w in weights]
    in_specs = [pl.BlockSpec((tile_b, n_in), lambda i: (i, 0))] + w_specs

    # Advisory cost estimate (true, unpadded dims) so XLA can overlap this op.
    flops = 2 * Bp * (n_in * (n_h_pad + n_out)
                      + n_hidden * n_hidden + n_hidden * n_out)
    transcendentals = 2 * Bp * n_hidden
    bytes_accessed = (2 * Bp * n_in + 4 * Bp * n_out
                      + sum(w.size * w.dtype.itemsize for w in weights))
    cost = pl.CostEstimate(flops=flops, transcendentals=transcendentals,
                           bytes_accessed=bytes_accessed)

    out_full = pl.pallas_call(
        _make_kernel(n_hidden, n_h_pad),
        out_shape=jax.ShapeDtypeStruct((Bp, n_out), jnp.float32),
        grid_spec=pltpu.PrefetchScalarGridSpec(
            num_scalar_prefetch=0,
            grid=(num_tiles,),
            in_specs=in_specs,
            out_specs=pl.BlockSpec((tile_b, n_out), lambda i: (i, 0)),
        ),
        compiler_params=pltpu.CompilerParams(
            dimension_semantics=("parallel",)),
        cost_estimate=cost,
    )(xu, *weights)

    out = out_full if Bp == B else out_full[:B]
    return out.reshape((B,) + ny)


def init_params(key, n_in, n_hidden, n_out):
    """Mirror the PyTorch module's init.

    net_lin: Linear(n_in, n_out)        -> default uniform weight + bias
    ffnn:    Linear(n_in, n_hidden)     -> uniform weight, ZERO bias
             Linear(n_hidden, n_hidden) -> uniform weight, ZERO bias
             Linear(n_hidden, n_out)    -> uniform weight, ZERO bias
    Weights stored transposed as [in, out]; biases as [1, out] rows.
    """
    ks = jax.random.split(key, 5)

    def uni(k, shape, fan_in):
        bound = 1.0 / math.sqrt(fan_in)
        return jax.random.uniform(k, shape, jnp.float32, -bound, bound)

    wl = uni(ks[0], (n_in, n_out), n_in)
    bl = uni(ks[1], (1, n_out), n_in)
    w1 = uni(ks[2], (n_in, n_hidden), n_in)
    b1 = jnp.zeros((1, n_hidden), jnp.float32)
    w2 = uni(ks[3], (n_hidden, n_hidden), n_hidden)
    b2 = jnp.zeros((1, n_hidden), jnp.float32)
    w3 = uni(ks[4], (n_hidden, n_out), n_hidden)
    b3 = jnp.zeros((1, n_out), jnp.float32)
    return (wl, bl, w1, b1, w2, b2, w3, b3)


def reference_forward(x, params, ny, u=None):
    """Pure-f32 JAX reference of the PyTorch forward."""
    B = x.shape[0]
    xu = x if u is None else jnp.concatenate([x, u.reshape(B, -1)], axis=1)
    wl, bl, w1, b1, w2, b2, w3, b3 = params
    lin = xu @ wl + bl
    h = jnp.tanh(xu @ w1 + b1)
    h = jnp.tanh(h @ w2 + b2)
    return (lin + h @ w3 + b3).reshape((B,) + tuple(ny))


def reference_forward_bf16(x, params, ny, u=None):
    """Reference with the kernel's mixed precision (bf16 MXU ops, f32 accum)."""
    B = x.shape[0]
    xu = x if u is None else jnp.concatenate([x, u.reshape(B, -1)], axis=1)
    xu = xu.astype(jnp.bfloat16)
    wl, bl, w1, b1, w2, b2, w3, b3 = params

    def dot(a, b):
        return jnp.dot(a.astype(jnp.bfloat16), b.astype(jnp.bfloat16),
                       preferred_element_type=jnp.float32)

    lin = dot(xu, wl) + bl
    h = jnp.tanh(dot(xu, w1) + b1)
    h = jnp.tanh(dot(h, w2) + b2)
    return (lin + dot(h, w3) + b3).reshape((B,) + tuple(ny))


if __name__ == "__main__":
    # default_output_net shapes: state nx=8, feedthrough input nu=3, ny=(2,),
    # 64 hidden nodes, 2 hidden tanh layers.
    nx, nu, ny = 8, 3, (2,)
    n_hidden = 64

    key = jax.random.PRNGKey(0)
    k_x, k_u, k_p1, k_p2, k_x3, k_u3 = jax.random.split(key, 6)

    # Case 1: feedthrough=True, small batch -> single padded grid step.
    B = 300
    params = init_params(k_p1, nx + nu, n_hidden, 2)
    prepared = prepare_params(params)          # one-time packing (hoisted)
    x = jax.random.normal(k_x, (B, nx), jnp.float32)
    u = jax.random.normal(k_u, (B, nu), jnp.float32)
    out = jax.block_until_ready(default_output_net_pallas(x, prepared, ny, u=u))
    ref16 = reference_forward_bf16(x, params, ny, u=u)
    ref32 = reference_forward(x, params, ny, u=u)
    assert out.shape == (B,) + ny
    assert jnp.allclose(out, ref16, atol=1e-2, rtol=1e-2), "mismatch vs bf16 ref"
    # bf16 MXU operands deviate from the f32 PyTorch reference; loose check:
    assert jnp.allclose(out, ref32, atol=2e-1, rtol=2e-1), "mismatch vs f32 ref"

    # Case 2: feedthrough=False (u=None), tiny batch.
    B2 = 2
    params2 = init_params(k_p2, nx, n_hidden, 2)
    prepared2 = prepare_params(params2)
    x2 = jax.random.normal(k_u, (B2, nx), jnp.float32)
    out2 = jax.block_until_ready(default_output_net_pallas(x2, prepared2, ny))
    ref2 = reference_forward_bf16(x2, params2, ny)
    assert out2.shape == (B2,) + ny
    assert jnp.allclose(out2, ref2, atol=1e-2, rtol=1e-2), "mismatch (no feedthrough)"

    # Case 3: feedthrough=True, multi-tile path (2 balanced "parallel" tiles).
    B3 = 1300
    x3 = jax.random.normal(k_x3, (B3, nx), jnp.float32)
    u3 = jax.random.normal(k_u3, (B3, nu), jnp.float32)
    out3 = jax.block_until_ready(default_output_net_pallas(x3, prepared, ny, u=u3))
    ref3 = reference_forward_bf16(x3, params, ny, u=u3)
    assert out3.shape == (B3,) + ny
    assert jnp.allclose(out3, ref3, atol=1e-2, rtol=1e-2), "mismatch (multi-tile)"

    print("KERNEL_OK")
</pallas_src>

<mosaic_0001>
module attributes {stable_mosaic.version = 11 : i64} {
  func.func @kernel(%arg0: i32, %arg1: memref<304x11xbf16, #tpu.memory_space<vmem>>, %arg2: memref<11x130xbf16, #tpu.memory_space<vmem>>, %arg3: memref<1x130xf32, #tpu.memory_space<vmem>>, %arg4: memref<64x64xbf16, #tpu.memory_space<vmem>>, %arg5: memref<1x64xf32, #tpu.memory_space<vmem>>, %arg6: memref<64x2xbf16, #tpu.memory_space<vmem>>, %arg7: memref<1x2xf32, #tpu.memory_space<vmem>>, %arg8: memref<304x2xf32, #tpu.memory_space<vmem>>) attributes {dimension_semantics = [#tpu.dimension_semantics<parallel>], iteration_bounds = array<i64: 1>, scalar_prefetch = 0 : i64, scratch_operands = 0 : i64, tpu.core_type = #tpu.core_type<tc>, window_params = [{transform_indices = @transform_0, window_bounds = array<i64: 304, 11>}, {pipeline_mode = #tpu.pipeline_mode<synchronous>, transform_indices = @transform_1, window_bounds = array<i64: 11, 130>}, {pipeline_mode = #tpu.pipeline_mode<synchronous>, transform_indices = @transform_2, window_bounds = array<i64: 1, 130>}, {pipeline_mode = #tpu.pipeline_mode<synchronous>, transform_indices = @transform_3, window_bounds = array<i64: 64, 64>}, {pipeline_mode = #tpu.pipeline_mode<synchronous>, transform_indices = @transform_4, window_bounds = array<i64: 1, 64>}, {pipeline_mode = #tpu.pipeline_mode<synchronous>, transform_indices = @transform_5, window_bounds = array<i64: 64, 2>}, {pipeline_mode = #tpu.pipeline_mode<synchronous>, transform_indices = @transform_6, window_bounds = array<i64: 1, 2>}, {transform_indices = @transform_7, window_bounds = array<i64: 304, 2>}]} {
    %c0 = arith.constant 0 : index
    %c0_0 = arith.constant 0 : index
    %0 = vector.load %arg1[%c0, %c0_0] : memref<304x11xbf16, #tpu.memory_space<vmem>>, vector<304x11xbf16>
    %c0_1 = arith.constant 0 : index
    %c0_2 = arith.constant 0 : index
    %1 = vector.load %arg2[%c0_1, %c0_2] : memref<11x130xbf16, #tpu.memory_space<vmem>>, vector<11x130xbf16>
    %cst = arith.constant dense<0.000000e+00> : vector<304x130xf32>
    %2 = tpu.matmul %0, %1, %cst {dimension_numbers = #tpu.dot_dimension_numbers<[1], [0], [0], [1], [0, 0, 1, 1], [], []>} : vector<304x11xbf16>, vector<11x130xbf16>, vector<304x130xf32> -> vector<304x130xf32>
    %c0_3 = arith.constant 0 : index
    %c0_4 = arith.constant 0 : index
    %3 = vector.load %arg3[%c0_3, %c0_4] : memref<1x130xf32, #tpu.memory_space<vmem>>, vector<1x130xf32>
    %4 = vector.broadcast %3 : vector<1x130xf32> to vector<304x130xf32>
    %5 = arith.addf %2, %4 : vector<304x130xf32>
    %6 = vector.extract_strided_slice %5 {offsets = [0, 0], sizes = [304, 64], strides = [1, 1]} : vector<304x130xf32> to vector<304x64xf32>
    %7 = math.tanh %6 : vector<304x64xf32>
    %8 = vector.extract_strided_slice %5 {offsets = [0, 128], sizes = [304, 2], strides = [1, 1]} : vector<304x130xf32> to vector<304x2xf32>
    %9 = arith.truncf %7 : vector<304x64xf32> to vector<304x64xbf16>
    %c0_5 = arith.constant 0 : index
    %c0_6 = arith.constant 0 : index
    %10 = vector.load %arg4[%c0_5, %c0_6] : memref<64x64xbf16, #tpu.memory_space<vmem>>, vector<64x64xbf16>
    %cst_7 = arith.constant dense<0.000000e+00> : vector<304x64xf32>
    %11 = tpu.matmul %9, %10, %cst_7 {dimension_numbers = #tpu.dot_dimension_numbers<[1], [0], [0], [1], [0, 0, 1, 1], [], []>} : vector<304x64xbf16>, vector<64x64xbf16>, vector<304x64xf32> -> vector<304x64xf32>
    %c0_8 = arith.constant 0 : index
    %c0_9 = arith.constant 0 : index
    %12 = vector.load %arg5[%c0_8, %c0_9] : memref<1x64xf32, #tpu.memory_space<vmem>>, vector<1x64xf32>
    %13 = vector.broadcast %12 : vector<1x64xf32> to vector<304x64xf32>
    %14 = arith.addf %11, %13 : vector<304x64xf32>
    %15 = math.tanh %14 : vector<304x64xf32>
    %16 = arith.truncf %15 : vector<304x64xf32> to vector<304x64xbf16>
    %c0_10 = arith.constant 0 : index
    %c0_11 = arith.constant 0 : index
    %17 = vector.load %arg6[%c0_10, %c0_11] : memref<64x2xbf16, #tpu.memory_space<vmem>>, vector<64x2xbf16>
    %cst_12 = arith.constant dense<0.000000e+00> : vector<304x2xf32>
    %18 = tpu.matmul %16, %17, %cst_12 {dimension_numbers = #tpu.dot_dimension_numbers<[1], [0], [0], [1], [0, 0, 1, 1], [], []>} : vector<304x64xbf16>, vector<64x2xbf16>, vector<304x2xf32> -> vector<304x2xf32>
    %c0_13 = arith.constant 0 : index
    %c0_14 = arith.constant 0 : index
    %19 = vector.load %arg7[%c0_13, %c0_14] : memref<1x2xf32, #tpu.memory_space<vmem>>, vector<1x2xf32>
    %20 = vector.broadcast %19 : vector<1x2xf32> to vector<304x2xf32>
    %21 = arith.addf %18, %20 : vector<304x2xf32>
    %22 = arith.addf %8, %21 : vector<304x2xf32>
    %c0_15 = arith.constant 0 : index
    %c0_16 = arith.constant 0 : index
    %23 = vector.load %arg8[%c0_15, %c0_16] : memref<304x2xf32, #tpu.memory_space<vmem>>, vector<304x2xf32>
    tpu.vector_store %arg8[%c0_15, %c0_16], %22 {strides = array<i32>} : memref<304x2xf32, #tpu.memory_space<vmem>>, vector<304x2xf32>,
    return
  }
  func.func @transform_0(%arg0: i32) -> (i32, i32) {
    %c0_i32 = arith.constant 0 : i32
    %c0_i32_0 = arith.constant 0 : i32
    return %arg0, %c0_i32 : i32, i32
  }
  func.func @transform_1(%arg0: i32) -> (i32, i32) {
    %c0_i32 = arith.constant 0 : i32
    %c0_i32_0 = arith.constant 0 : i32
    %c0_i32_1 = arith.constant 0 : i32
    return %c0_i32, %c0_i32_0 : i32, i32
  }
  func.func @transform_2(%arg0: i32) -> (i32, i32) {
    %c0_i32 = arith.constant 0 : i32
    %c0_i32_0 = arith.constant 0 : i32
    %c0_i32_1 = arith.constant 0 : i32
    return %c0_i32, %c0_i32_0 : i32, i32
  }
  func.func @transform_3(%arg0: i32) -> (i32, i32) {
    %c0_i32 = arith.constant 0 : i32
    %c0_i32_0 = arith.constant 0 : i32
    %c0_i32_1 = arith.constant 0 : i32
    return %c0_i32, %c0_i32_0 : i32, i32
  }
  func.func @transform_4(%arg0: i32) -> (i32, i32) {
    %c0_i32 = arith.constant 0 : i32
    %c0_i32_0 = arith.constant 0 : i32
    %c0_i32_1 = arith.constant 0 : i32
    return %c0_i32, %c0_i32_0 : i32, i32
  }
  func.func @transform_5(%arg0: i32) -> (i32, i32) {
    %c0_i32 = arith.constant 0 : i32
    %c0_i32_0 = arith.constant 0 : i32
    %c0_i32_1 = arith.constant 0 : i32
    return %c0_i32, %c0_i32_0 : i32, i32
  }
  func.func @transform_6(%arg0: i32) -> (i32, i32) {
    %c0_i32 = arith.constant 0 : i32
    %c0_i32_0 = arith.constant 0 : i32
    %c0_i32_1 = arith.constant 0 : i32
    return %c0_i32, %c0_i32_0 : i32, i32
  }
  func.func @transform_7(%arg0: i32) -> (i32, i32) {
    %c0_i32 = arith.constant 0 : i32
    %c0_i32_0 = arith.constant 0 : i32
    return %arg0, %c0_i32 : i32, i32
  }
}

</mosaic_0001>

<llo_original>
// kernel: tpu_custom_call.1
$region0: #{tpu_custom_call.1}
  #allocation0 [shape = 'u32[]', space=smem, size = 0x4, offset = 0x4, fixed_abs, tag = 'smem constant byte address 0x4 - core index']
  #allocation1 [shape = 'u32[72,128]{1,0:T(1,128)}', space=vmem, size = 0x9000, scoped, tag = 'internal scratch']
  %s0 = inlined_call_operand.vmem [shape: bf16[304,11], index: 0, kind: input, shape index: {}]
  %s1 = inlined_call_operand.vmem [shape: bf16[11,130], index: 1, kind: input, shape index: {}]
  %s2 = inlined_call_operand.vmem [shape: f32[1,130], index: 2, kind: input, shape index: {}]
  %s3 = inlined_call_operand.vmem [shape: bf16[64,64], index: 3, kind: input, shape index: {}]
  %s4 = inlined_call_operand.vmem [shape: f32[1,64], index: 4, kind: input, shape index: {}]
  %s5 = inlined_call_operand.vmem [shape: bf16[64,2], index: 5, kind: input, shape index: {}]
  %s6 = inlined_call_operand.vmem [shape: f32[1,2], index: 6, kind: input, shape index: {}]
  %s7 = inlined_call_operand.vmem [shape: f32[304,2], index: 7, kind: output, shape index: {}]
  %s8 = sld [smem:[#allocation0]]
  $region38: #{tpu_custom_call.1} parent=0
    _
  %s10 = ssub.s32 1, %s8
  %s11 = scalar_select 0, %s10, %s8
  // Predicated region
  $region2: #{tpu_custom_call.1} parent=0 // pred_check
    _
  $region3: #{tpu_custom_call.1} parent=0 // pred_check_branch
    %13 = sbr.rel (0) target = $region5
  $region4: #{tpu_custom_call.1} parent=0 // pred_region
    _
  $region5: #{tpu_custom_call.1} parent=0 // pred_fallthru
    _
  // Predicated region
  $region6: #{tpu_custom_call.1} parent=0 // pred_check
    _
  $region7: #{tpu_custom_call.1} parent=0 // pred_check_branch
    %15 = sbr.rel (0) target = $region9
  $region8: #{tpu_custom_call.1} parent=0 // pred_region
    _
  $region9: #{tpu_custom_call.1} parent=0 // pred_fallthru
    _
  // Predicated region
  $region10: #{tpu_custom_call.1} parent=0 // pred_check
    _
  $region11: #{tpu_custom_call.1} parent=0 // pred_check_branch
    %17 = sbr.rel (0) target = $region13
  $region12: #{tpu_custom_call.1} parent=0 // pred_region
    _
  $region13: #{tpu_custom_call.1} parent=0 // pred_fallthru
    _
  // Predicated region
  $region14: #{tpu_custom_call.1} parent=0 // pred_check
    _
  $region15: #{tpu_custom_call.1} parent=0 // pred_check_branch
    %19 = sbr.rel (0) target = $region17
  $region16: #{tpu_custom_call.1} parent=0 // pred_region
    _
  $region17: #{tpu_custom_call.1} parent=0 // pred_fallthru
    _
  // Predicated region
  $region18: #{tpu_custom_call.1} parent=0 // pred_check
    _
  $region19: #{tpu_custom_call.1} parent=0 // pred_check_branch
    %21 = sbr.rel (0) target = $region21
  $region20: #{tpu_custom_call.1} parent=0 // pred_region
    _
  $region21: #{tpu_custom_call.1} parent=0 // pred_fallthru
    _
  // Predicated region
  $region22: #{tpu_custom_call.1} parent=0 // pred_check
    _
  $region23: #{tpu_custom_call.1} parent=0 // pred_check_branch
    %23 = sbr.rel (0) target = $region25
  $region24: #{tpu_custom_call.1} parent=0 // pred_region
    _
  $region25: #{tpu_custom_call.1} parent=0 // pred_fallthru
    _
  // Predicated region
  $region26: #{tpu_custom_call.1} parent=0 // pred_check
    _
  $region27: #{tpu_custom_call.1} parent=0 // pred_check_branch
    %25 = sbr.rel (0) target = $region29
  $region28: #{tpu_custom_call.1} parent=0 // pred_region
    _
  $region29: #{tpu_custom_call.1} parent=0 // pred_fallthru
    _
  %v27 = vld [vmem:[%s0] sm:$0xf]
  %v28 = vld [vmem:[%s0 + $0x4] sm:$0xf]
  %v29 = vld [vmem:[%s0 + $0x8] sm:$0xf]
  %v30 = vld [vmem:[%s0 + $0xc] sm:$0xf]
  %v31 = vld [vmem:[%s0 + $0x10] sm:$0xf]
  %v32 = vld [vmem:[%s0 + $0x14] sm:$0xf]
  %v33 = vld [vmem:[%s0 + $0x18] sm:$0xf]
  %v34 = vld [vmem:[%s0 + $0x1c] sm:$0xf]
  %v35 = vld [vmem:[%s0 + $0x20] sm:$0xf]
  %v36 = vld [vmem:[%s0 + $0x24] sm:$0xf]
  %v37 = vld [vmem:[%s0 + $0x28] sm:$0xf]
  %v38 = vld [vmem:[%s0 + $0x2c] sm:$0xf]
  %v39 = vld [vmem:[%s0 + $0x30] sm:$0xf]
  %v40 = vld [vmem:[%s0 + $0x34] sm:$0xf]
  %v41 = vld [vmem:[%s0 + $0x38] sm:$0xf]
  %v42 = vld [vmem:[%s0 + $0x3c] sm:$0xf]
  %v43 = vld [vmem:[%s0 + $0x40] sm:$0xf]
  %v44 = vld [vmem:[%s0 + $0x44] sm:$0xf]
  %v45 = vld [vmem:[%s0 + $0x48] sm:$0xf]
  %v46 = vld [vmem:[%s0 + $0x4c] sm:$0xf]
  %v47 = vld [vmem:[%s0 + $0x50] sm:$0xf]
  %v48 = vld [vmem:[%s0 + $0x54] sm:$0xf]
  %v49 = vld [vmem:[%s0 + $0x58] sm:$0xf]
  %v50 = vld [vmem:[%s0 + $0x5c] sm:$0xf]
  %v51 = vld [vmem:[%s0 + $0x60] sm:$0xf]
  %v52 = vld [vmem:[%s0 + $0x64] sm:$0xf]
  %v53 = vld [vmem:[%s0 + $0x68] sm:$0xf]
  %v54 = vld [vmem:[%s0 + $0x6c] sm:$0xf]
  %v55 = vld [vmem:[%s0 + $0x70] sm:$0xf]
  %v56 = vld [vmem:[%s0 + $0x74] sm:$0xf]
  %v57 = vld [vmem:[%s0 + $0x78] sm:$0xf]
  %v58 = vld [vmem:[%s0 + $0x7c] sm:$0xf]
  %v59 = vld [vmem:[%s0 + $0x80] sm:$0xf]
  %v60 = vld [vmem:[%s0 + $0x84] sm:$0xf]
  %v61 = vld [vmem:[%s0 + $0x88] sm:$0xf]
  %v62 = vld [vmem:[%s0 + $0x8c] sm:$0xf]
  %v63 = vld [vmem:[%s0 + $0x90] sm:$0xf]
  %v64 = vld [vmem:[%s0 + $0x94] sm:$0xf]
  %v65 = vld [vmem:[%s1] sm:$0xff]
  %v66 = vld [vmem:[%s1 + $0x8] sm:$0x33]
  %v67 = vld [vmem:[%s2] sm:$0x3]
  %v69 = vperm.slane %v67, 0
  %v70 = vperm.slane %v67, 1
  %v111 = vunpack.c.l.b16 %v27
  %v112 = vunpack.c.l.b16 %v28
  %v113 = vunpack.c.l.b16 %v29
  %v114 = vunpack.c.l.b16 %v30
  %v115 = vunpack.c.l.b16 %v31
  %v116 = vunpack.c.l.b16 %v32
  %v117 = vunpack.c.l.b16 %v33
  %v118 = vunpack.c.l.b16 %v34
  %v119 = vunpack.c.l.b16 %v35
  %v120 = vunpack.c.l.b16 %v36
  %v121 = vunpack.c.l.b16 %v37
  %v122 = vunpack.c.l.b16 %v38
  %v123 = vunpack.c.l.b16 %v39
  %v124 = vunpack.c.l.b16 %v40
  %v125 = vunpack.c.l.b16 %v41
  %v126 = vunpack.c.l.b16 %v42
  %v127 = vunpack.c.l.b16 %v43
  %v128 = vunpack.c.l.b16 %v44
  %v129 = vunpack.c.l.b16 %v45
  %v130 = vunpack.c.l.b16 %v46
  %v131 = vunpack.c.l.b16 %v47
  %v132 = vunpack.c.l.b16 %v48
  %v133 = vunpack.c.l.b16 %v49
  %v134 = vunpack.c.l.b16 %v50
  %v135 = vunpack.c.l.b16 %v51
  %v136 = vunpack.c.l.b16 %v52
  %v137 = vunpack.c.l.b16 %v53
  %v138 = vunpack.c.l.b16 %v54
  %v139 = vunpack.c.l.b16 %v55
  %v140 = vunpack.c.l.b16 %v56
  %v141 = vunpack.c.l.b16 %v57
  %v142 = vunpack.c.l.b16 %v58
  %v143 = vunpack.c.l.b16 %v59
  %v144 = vunpack.c.l.b16 %v60
  %v145 = vunpack.c.l.b16 %v61
  %v146 = vunpack.c.l.b16 %v62
  %v147 = vunpack.c.l.b16 %v63
  %v148 = vunpack.c.l.b16 %v64
  %v149 = vpack.c.b16 %v112, %v111
  %v150 = vpack.c.b16 %v114, %v113
  %v151 = vpack.c.b16 %v116, %v115
  %v152 = vpack.c.b16 %v118, %v117
  %v153 = vpack.c.b16 %v120, %v119
  %v154 = vpack.c.b16 %v122, %v121
  %v155 = vpack.c.b16 %v124, %v123
  %v156 = vpack.c.b16 %v126, %v125
  %v157 = vpack.c.b16 %v128, %v127
  %v158 = vpack.c.b16 %v130, %v129
  %v159 = vpack.c.b16 %v132, %v131
  %v160 = vpack.c.b16 %v134, %v133
  %v161 = vpack.c.b16 %v136, %v135
  %v162 = vpack.c.b16 %v138, %v137
  %v163 = vpack.c.b16 %v140, %v139
  %v164 = vpack.c.b16 %v142, %v141
  %v165 = vpack.c.b16 %v144, %v143
  %v166 = vpack.c.b16 %v146, %v145
  %v167 = vpack.c.b16 %v148, %v147
  %v170 = vunpack.c.l.b16 %v65
  %v171 = vunpack.c.h.b16 %v65
  %v172 = vunpack.c.l.b16 %v66
  %v173 = vunpack.c.h.b16 %v66
  %v174 = vpack.c.b16 %v172, %v170
  %v175 = vpack.c.b16 %v173, %v171
  %vm176 = vcmask 89088
  %v178 = vsel %vm176, %v149, 0
  %v181 = vsel %vm176, %v150, 0
  %v184 = vsel %vm176, %v151, 0
  %v187 = vsel %vm176, %v152, 0
  %v190 = vsel %vm176, %v153, 0
  %v193 = vsel %vm176, %v154, 0
  %v196 = vsel %vm176, %v155, 0
  %v199 = vsel %vm176, %v156, 0
  %v202 = vsel %vm176, %v157, 0
  %v205 = vsel %vm176, %v158, 0
  %v208 = vsel %vm176, %v159, 0
  %v211 = vsel %vm176, %v160, 0
  %v214 = vsel %vm176, %v161, 0
  %v217 = vsel %vm176, %v162, 0
  %v220 = vsel %vm176, %v163, 0
  %v223 = vsel %vm176, %v164, 0
  %v226 = vsel %vm176, %v165, 0
  %v229 = vsel %vm176, %v166, 0
  %v232 = vsel %vm176, %v167, 0
  %vm234 = vcmask 1044480
  %vm235 = vcmask 1045504
  %v236 = vsel %vm234, 4294967295, 65535
  %v237 = vsel %vm235, %v236, 0
  %v239 = vand.u32 %v174, %v237
  %v242 = vand.u32 %v175, %v237
  %244 = vmatpush.bf16.msra.mxu0 0
  %245 = vmatpush.bf16.msra.mxu0 0
  %246 = vmatpush.bf16.msra.mxu0 0
  %247 = vmatpush.bf16.msra.mxu0 0
  %248 = vmatpush.bf16.msra.mxu0 0
  %249 = vmatpush.bf16.msra.mxu0 0
  %250 = vmatpush.bf16.msra.mxu0 0
  %251 = vmatpush.bf16.msra.mxu0 %v239
  %252 = vmatmul.bf16.gmra.mxu0 %v178
  %v253 = vpop.f32.mrf.mxu0
  %v254 = vadd.f32 %v69, %v253
  %v255 = vpop.f32.mrf.mxu0
  %v256 = vadd.f32 %v69, %v255
  %257 = vmatmul.bf16.gmra.mxu0 %v181
  %v258 = vpop.f32.mrf.mxu0
  %v259 = vadd.f32 %v69, %v258
  %v260 = vpop.f32.mrf.mxu0
  %v261 = vadd.f32 %v69, %v260
  %262 = vmatmul.bf16.gmra.mxu0 %v184
  %v263 = vpop.f32.mrf.mxu0
  %v264 = vadd.f32 %v69, %v263
  %v265 = vpop.f32.mrf.mxu0
  %v266 = vadd.f32 %v69, %v265
  %267 = vmatmul.bf16.gmra.mxu0 %v187
  %v268 = vpop.f32.mrf.mxu0
  %v269 = vadd.f32 %v69, %v268
  %v270 = vpop.f32.mrf.mxu0
  %v271 = vadd.f32 %v69, %v270
  %272 = vmatmul.bf16.gmra.mxu0 %v190
  %v273 = vpop.f32.mrf.mxu0
  %v274 = vadd.f32 %v69, %v273
  %v275 = vpop.f32.mrf.mxu0
  %v276 = vadd.f32 %v69, %v275
  %277 = vmatmul.bf16.gmra.mxu0 %v193
  %v278 = vpop.f32.mrf.mxu0
  %v279 = vadd.f32 %v69, %v278
  %v280 = vpop.f32.mrf.mxu0
  %v281 = vadd.f32 %v69, %v280
  %282 = vmatmul.bf16.gmra.mxu0 %v196
  %v283 = vpop.f32.mrf.mxu0
  %v284 = vadd.f32 %v69, %v283
  %v285 = vpop.f32.mrf.mxu0
  %v286 = vadd.f32 %v69, %v285
  %287 = vmatmul.bf16.gmra.mxu0 %v199
  %v288 = vpop.f32.mrf.mxu0
  %v289 = vadd.f32 %v69, %v288
  %v290 = vpop.f32.mrf.mxu0
  %v291 = vadd.f32 %v69, %v290
  %292 = vmatmul.bf16.gmra.mxu0 %v202
  %v293 = vpop.f32.mrf.mxu0
  %v294 = vadd.f32 %v69, %v293
  %v295 = vpop.f32.mrf.mxu0
  %v296 = vadd.f32 %v69, %v295
  %297 = vmatmul.bf16.gmra.mxu0 %v205
  %v298 = vpop.f32.mrf.mxu0
  %v299 = vadd.f32 %v69, %v298
  %v300 = vpop.f32.mrf.mxu0
  %v301 = vadd.f32 %v69, %v300
  %302 = vmatmul.bf16.gmra.mxu0 %v208
  %v303 = vpop.f32.mrf.mxu0
  %v304 = vadd.f32 %v69, %v303
  %v305 = vpop.f32.mrf.mxu0
  %v306 = vadd.f32 %v69, %v305
  %307 = vmatmul.bf16.gmra.mxu0 %v211
  %v308 = vpop.f32.mrf.mxu0
  %v309 = vadd.f32 %v69, %v308
  %v310 = vpop.f32.mrf.mxu0
  %v311 = vadd.f32 %v69, %v310
  %312 = vmatmul.bf16.gmra.mxu0 %v214
  %v313 = vpop.f32.mrf.mxu0
  %v314 = vadd.f32 %v69, %v313
  %v315 = vpop.f32.mrf.mxu0
  %v316 = vadd.f32 %v69, %v315
  %317 = vmatmul.bf16.gmra.mxu0 %v217
  %v318 = vpop.f32.mrf.mxu0
  %v319 = vadd.f32 %v69, %v318
  %v320 = vpop.f32.mrf.mxu0
  %v321 = vadd.f32 %v69, %v320
  %322 = vmatmul.bf16.gmra.mxu0 %v220
  %v323 = vpop.f32.mrf.mxu0
  %v324 = vadd.f32 %v69, %v323
  %v325 = vpop.f32.mrf.mxu0
  %v326 = vadd.f32 %v69, %v325
  %327 = vmatmul.bf16.gmra.mxu0 %v223
  %v328 = vpop.f32.mrf.mxu0
  %v329 = vadd.f32 %v69, %v328
  %v330 = vpop.f32.mrf.mxu0
  %v331 = vadd.f32 %v69, %v330
  %332 = vmatmul.bf16.gmra.mxu0 %v226
  %v333 = vpop.f32.mrf.mxu0
  %v334 = vadd.f32 %v69, %v333
  %v335 = vpop.f32.mrf.mxu0
  %v336 = vadd.f32 %v69, %v335
  %337 = vmatmul.bf16.gmra.mxu0 %v229
  %v338 = vpop.f32.mrf.mxu0
  %v339 = vadd.f32 %v69, %v338
  %v340 = vpop.f32.mrf.mxu0
  %v341 = vadd.f32 %v69, %v340
  %342 = vmatmul.bf16.gmra.mxu0 %v232
  %v343 = vpop.f32.mrf.mxu0
  %v344 = vadd.f32 %v69, %v343
  %v345 = vpop.f32.mrf.mxu0
  %v346 = vadd.f32 %v69, %v345
  %347 = vdwg.mxu0
  %348 = vmatpush.bf16.msra.mxu0 0
  %349 = vmatpush.bf16.msra.mxu0 0
  %350 = vmatpush.bf16.msra.mxu0 0
  %351 = vmatpush.bf16.msra.mxu0 0
  %352 = vmatpush.bf16.msra.mxu0 0
  %353 = vmatpush.bf16.msra.mxu0 0
  %354 = vmatpush.bf16.msra.mxu0 0
  %355 = vmatpush.bf16.msra.mxu0 %v242
  %356 = vmatmul.bf16.gmra.mxu0 %v178
  %v357 = vpop.f32.mrf.mxu0
  %v358 = vadd.f32 %v70, %v357
  %v359 = vpop.f32.mrf.mxu0
  %v360 = vadd.f32 %v70, %v359
  %361 = vmatmul.bf16.gmra.mxu0 %v181
  %v362 = vpop.f32.mrf.mxu0
  %v363 = vadd.f32 %v70, %v362
  %v364 = vpop.f32.mrf.mxu0
  %v365 = vadd.f32 %v70, %v364
  %366 = vmatmul.bf16.gmra.mxu0 %v184
  %v367 = vpop.f32.mrf.mxu0
  %v368 = vadd.f32 %v70, %v367
  %v369 = vpop.f32.mrf.mxu0
  %v370 = vadd.f32 %v70, %v369
  %371 = vmatmul.bf16.gmra.mxu0 %v187
  %v372 = vpop.f32.mrf.mxu0
  %v373 = vadd.f32 %v70, %v372
  %v374 = vpop.f32.mrf.mxu0
  %v375 = vadd.f32 %v70, %v374
  %376 = vmatmul.bf16.gmra.mxu0 %v190
  %v377 = vpop.f32.mrf.mxu0
  %v378 = vadd.f32 %v70, %v377
  %v379 = vpop.f32.mrf.mxu0
  %v380 = vadd.f32 %v70, %v379
  %381 = vmatmul.bf16.gmra.mxu0 %v193
  %v382 = vpop.f32.mrf.mxu0
  %v383 = vadd.f32 %v70, %v382
  %v384 = vpop.f32.mrf.mxu0
  %v385 = vadd.f32 %v70, %v384
  %386 = vmatmul.bf16.gmra.mxu0 %v196
  %v387 = vpop.f32.mrf.mxu0
  %v388 = vadd.f32 %v70, %v387
  %v389 = vpop.f32.mrf.mxu0
  %v390 = vadd.f32 %v70, %v389
  %391 = vmatmul.bf16.gmra.mxu0 %v199
  %v392 = vpop.f32.mrf.mxu0
  %v393 = vadd.f32 %v70, %v392
  %v394 = vpop.f32.mrf.mxu0
  %v395 = vadd.f32 %v70, %v394
  %396 = vmatmul.bf16.gmra.mxu0 %v202
  %v397 = vpop.f32.mrf.mxu0
  %v398 = vadd.f32 %v70, %v397
  %v399 = vpop.f32.mrf.mxu0
  %v400 = vadd.f32 %v70, %v399
  %401 = vmatmul.bf16.gmra.mxu0 %v205
  %v402 = vpop.f32.mrf.mxu0
  %v403 = vadd.f32 %v70, %v402
  %v404 = vpop.f32.mrf.mxu0
  %v405 = vadd.f32 %v70, %v404
  %406 = vmatmul.bf16.gmra.mxu0 %v208
  %v407 = vpop.f32.mrf.mxu0
  %v408 = vadd.f32 %v70, %v407
  %v409 = vpop.f32.mrf.mxu0
  %v410 = vadd.f32 %v70, %v409
  %411 = vmatmul.bf16.gmra.mxu0 %v211
  %v412 = vpop.f32.mrf.mxu0
  %v413 = vadd.f32 %v70, %v412
  %v414 = vpop.f32.mrf.mxu0
  %v415 = vadd.f32 %v70, %v414
  %416 = vmatmul.bf16.gmra.mxu0 %v214
  %v417 = vpop.f32.mrf.mxu0
  %v418 = vadd.f32 %v70, %v417
  %v419 = vpop.f32.mrf.mxu0
  %v420 = vadd.f32 %v70, %v419
  %421 = vmatmul.bf16.gmra.mxu0 %v217
  %v422 = vpop.f32.mrf.mxu0
  %v423 = vadd.f32 %v70, %v422
  %v424 = vpop.f32.mrf.mxu0
  %v425 = vadd.f32 %v70, %v424
  %426 = vmatmul.bf16.gmra.mxu0 %v220
  %v427 = vpop.f32.mrf.mxu0
  %v428 = vadd.f32 %v70, %v427
  %v429 = vpop.f32.mrf.mxu0
  %v430 = vadd.f32 %v70, %v429
  %431 = vmatmul.bf16.gmra.mxu0 %v223
  %v432 = vpop.f32.mrf.mxu0
  %v433 = vadd.f32 %v70, %v432
  %v434 = vpop.f32.mrf.mxu0
  %v435 = vadd.f32 %v70, %v434
  %436 = vmatmul.bf16.gmra.mxu0 %v226
  %v437 = vpop.f32.mrf.mxu0
  %v438 = vadd.f32 %v70, %v437
  %v439 = vpop.f32.mrf.mxu0
  %v440 = vadd.f32 %v70, %v439
  %441 = vmatmul.bf16.gmra.mxu0 %v229
  %v442 = vpop.f32.mrf.mxu0
  %v443 = vadd.f32 %v70, %v442
  %v444 = vpop.f32.mrf.mxu0
  %v445 = vadd.f32 %v70, %v444
  %446 = vmatmul.bf16.gmra.mxu0 %v232
  %v447 = vpop.f32.mrf.mxu0
  %v448 = vadd.f32 %v70, %v447
  %v449 = vpop.f32.mrf.mxu0
  %v450 = vadd.f32 %v70, %v449
  %451 = vdwg.mxu0
  %v452 = vtanh.pop %v254
  %v453 = vtanh.pop %v256
  %v454 = vtanh.pop %v259
  %v455 = vtanh.pop %v261
  %v456 = vtanh.pop %v264
  %v457 = vtanh.pop %v266
  %v458 = vtanh.pop %v269
  %v459 = vtanh.pop %v271
  %v460 = vtanh.pop %v274
  %v461 = vtanh.pop %v276
  %v462 = vtanh.pop %v279
  %v463 = vtanh.pop %v281
  %v464 = vtanh.pop %v284
  %v465 = vtanh.pop %v286
  %v466 = vtanh.pop %v289
  %v467 = vtanh.pop %v291
  %v468 = vtanh.pop %v294
  %v469 = vtanh.pop %v296
  %v470 = vtanh.pop %v299
  %v471 = vtanh.pop %v301
  %v472 = vtanh.pop %v304
  %v473 = vtanh.pop %v306
  %v474 = vtanh.pop %v309
  %v475 = vtanh.pop %v311
  %v476 = vtanh.pop %v314
  %v477 = vtanh.pop %v316
  %v478 = vtanh.pop %v319
  %v479 = vtanh.pop %v321
  %v480 = vtanh.pop %v324
  %v481 = vtanh.pop %v326
  %v482 = vtanh.pop %v329
  %v483 = vtanh.pop %v331
  %v484 = vtanh.pop %v334
  %v485 = vtanh.pop %v336
  %v486 = vtanh.pop %v339
  %v487 = vtanh.pop %v341
  %v488 = vtanh.pop %v344
  %v489 = vtanh.pop %v346
  %v490 = vpack.c.bf16 %v453, %v452
  %v491 = vpack.c.bf16 %v455, %v454
  %v492 = vpack.c.bf16 %v457, %v456
  %v493 = vpack.c.bf16 %v459, %v458
  %v494 = vpack.c.bf16 %v461, %v460
  %v495 = vpack.c.bf16 %v463, %v462
  %v496 = vpack.c.bf16 %v465, %v464
  %v497 = vpack.c.bf16 %v467, %v466
  %v498 = vpack.c.bf16 %v469, %v468
  %v499 = vpack.c.bf16 %v471, %v470
  %v500 = vpack.c.bf16 %v473, %v472
  %v501 = vpack.c.bf16 %v475, %v474
  %v502 = vpack.c.bf16 %v477, %v476
  %v503 = vpack.c.bf16 %v479, %v478
  %v504 = vpack.c.bf16 %v481, %v480
  %v505 = vpack.c.bf16 %v483, %v482
  %v506 = vpack.c.bf16 %v485, %v484
  %v507 = vpack.c.bf16 %v487, %v486
  %v508 = vpack.c.bf16 %v489, %v488
  %v509 = vld [vmem:[%s3] sm:$0xf]
  %v510 = vld [vmem:[%s3 + $0x4] sm:$0xf]
  %v511 = vld [vmem:[%s3 + $0x8] sm:$0xf]
  %v512 = vld [vmem:[%s3 + $0xc] sm:$0xf]
  %v513 = vld [vmem:[%s3 + $0x10] sm:$0xf]
  %v514 = vld [vmem:[%s3 + $0x14] sm:$0xf]
  %v515 = vld [vmem:[%s3 + $0x18] sm:$0xf]
  %v516 = vld [vmem:[%s3 + $0x1c] sm:$0xf]
  %v517 = vld [vmem:[%s4] sm:$0x1]
  %v519 = vperm.slane %v517, 0
  %v529 = vunpack.c.l.b16 %v509
  %v530 = vunpack.c.l.b16 %v510
  %v531 = vunpack.c.l.b16 %v511
  %v532 = vunpack.c.l.b16 %v512
  %v533 = vunpack.c.l.b16 %v513
  %v534 = vunpack.c.l.b16 %v514
  %v535 = vunpack.c.l.b16 %v515
  %v536 = vunpack.c.l.b16 %v516
  %v537 = vpack.c.b16 %v530, %v529
  %v538 = vpack.c.b16 %v532, %v531
  %v539 = vpack.c.b16 %v534, %v533
  %v540 = vpack.c.b16 %v536, %v535
  %vm545 = vcmask 523264
  %v547 = vsel %vm545, %v490, 0
  %v550 = vsel %vm545, %v491, 0
  %v553 = vsel %vm545, %v492, 0
  %v556 = vsel %vm545, %v493, 0
  %v559 = vsel %vm545, %v494, 0
  %v562 = vsel %vm545, %v495, 0
  %v565 = vsel %vm545, %v496, 0
  %v568 = vsel %vm545, %v497, 0
  %v571 = vsel %vm545, %v498, 0
  %v574 = vsel %vm545, %v499, 0
  %v577 = vsel %vm545, %v500, 0
  %v580 = vsel %vm545, %v501, 0
  %v583 = vsel %vm545, %v502, 0
  %v586 = vsel %vm545, %v503, 0
  %v589 = vsel %vm545, %v504, 0
  %v592 = vsel %vm545, %v505, 0
  %v595 = vsel %vm545, %v506, 0
  %v598 = vsel %vm545, %v507, 0
  %v601 = vsel %vm545, %v508, 0
  %603 = vmatpush.bf16.msra.mxu0 0
  %604 = vmatpush.bf16.msra.mxu0 0
  %605 = vmatpush.bf16.msra.mxu0 0
  %606 = vmatpush.bf16.msra.mxu0 0
  %607 = vmatpush.bf16.msra.mxu0 %v540
  %608 = vmatpush.bf16.msra.mxu0 %v539
  %609 = vmatpush.bf16.msra.mxu0 %v538
  %610 = vmatpush.bf16.msra.mxu0 %v537
  %611 = vmatmul.bf16.gmra.mxu0 %v547
  %v612 = vpop.f32.mrf.mxu0
  %v613 = vadd.f32 %v519, %v612
  %v614 = vpop.f32.mrf.mxu0
  %v615 = vadd.f32 %v519, %v614
  %616 = vmatmul.bf16.gmra.mxu0 %v550
  %v617 = vpop.f32.mrf.mxu0
  %v618 = vadd.f32 %v519, %v617
  %v619 = vpop.f32.mrf.mxu0
  %v620 = vadd.f32 %v519, %v619
  %621 = vmatmul.bf16.gmra.mxu0 %v553
  %v622 = vpop.f32.mrf.mxu0
  %v623 = vadd.f32 %v519, %v622
  %v624 = vpop.f32.mrf.mxu0
  %v625 = vadd.f32 %v519, %v624
  %626 = vmatmul.bf16.gmra.mxu0 %v556
  %v627 = vpop.f32.mrf.mxu0
  %v628 = vadd.f32 %v519, %v627
  %v629 = vpop.f32.mrf.mxu0
  %v630 = vadd.f32 %v519, %v629
  %631 = vmatmul.bf16.gmra.mxu0 %v559
  %v632 = vpop.f32.mrf.mxu0
  %v633 = vadd.f32 %v519, %v632
  %v634 = vpop.f32.mrf.mxu0
  %v635 = vadd.f32 %v519, %v634
  %636 = vmatmul.bf16.gmra.mxu0 %v562
  %v637 = vpop.f32.mrf.mxu0
  %v638 = vadd.f32 %v519, %v637
  %v639 = vpop.f32.mrf.mxu0
  %v640 = vadd.f32 %v519, %v639
  %641 = vmatmul.bf16.gmra.mxu0 %v565
  %v642 = vpop.f32.mrf.mxu0
  %v643 = vadd.f32 %v519, %v642
  %v644 = vpop.f32.mrf.mxu0
  %v645 = vadd.f32 %v519, %v644
  %646 = vmatmul.bf16.gmra.mxu0 %v568
  %v647 = vpop.f32.mrf.mxu0
  %v648 = vadd.f32 %v519, %v647
  %v649 = vpop.f32.mrf.mxu0
  %v650 = vadd.f32 %v519, %v649
  %651 = vmatmul.bf16.gmra.mxu0 %v571
  %v652 = vpop.f32.mrf.mxu0
  %v653 = vadd.f32 %v519, %v652
  %v654 = vpop.f32.mrf.mxu0
  %v655 = vadd.f32 %v519, %v654
  %656 = vmatmul.bf16.gmra.mxu0 %v574
  %v657 = vpop.f32.mrf.mxu0
  %v658 = vadd.f32 %v519, %v657
  %v659 = vpop.f32.mrf.mxu0
  %v660 = vadd.f32 %v519, %v659
  %661 = vmatmul.bf16.gmra.mxu0 %v577
  %v662 = vpop.f32.mrf.mxu0
  %v663 = vadd.f32 %v519, %v662
  %v664 = vpop.f32.mrf.mxu0
  %v665 = vadd.f32 %v519, %v664
  %666 = vmatmul.bf16.gmra.mxu0 %v580
  %v667 = vpop.f32.mrf.mxu0
  %v668 = vadd.f32 %v519, %v667
  %v669 = vpop.f32.mrf.mxu0
  %v670 = vadd.f32 %v519, %v669
  %671 = vmatmul.bf16.gmra.mxu0 %v583
  %v672 = vpop.f32.mrf.mxu0
  %v673 = vadd.f32 %v519, %v672
  %v674 = vpop.f32.mrf.mxu0
  %v675 = vadd.f32 %v519, %v674
  %676 = vmatmul.bf16.gmra.mxu0 %v586
  %v677 = vpop.f32.mrf.mxu0
  %v678 = vadd.f32 %v519, %v677
  %v679 = vpop.f32.mrf.mxu0
  %v680 = vadd.f32 %v519, %v679
  %681 = vmatmul.bf16.gmra.mxu0 %v589
  %v682 = vpop.f32.mrf.mxu0
  %v683 = vadd.f32 %v519, %v682
  %v684 = vpop.f32.mrf.mxu0
  %v685 = vadd.f32 %v519, %v684
  %686 = vmatmul.bf16.gmra.mxu0 %v592
  %v687 = vpop.f32.mrf.mxu0
  %v688 = vadd.f32 %v519, %v687
  %v689 = vpop.f32.mrf.mxu0
  %v690 = vadd.f32 %v519, %v689
  %691 = vmatmul.bf16.gmra.mxu0 %v595
  %v692 = vpop.f32.mrf.mxu0
  %v693 = vadd.f32 %v519, %v692
  %v694 = vpop.f32.mrf.mxu0
  %v695 = vadd.f32 %v519, %v694
  %696 = vmatmul.bf16.gmra.mxu0 %v598
  %v697 = vpop.f32.mrf.mxu0
  %v698 = vadd.f32 %v519, %v697
  %v699 = vpop.f32.mrf.mxu0
  %v700 = vadd.f32 %v519, %v699
  %701 = vmatmul.bf16.gmra.mxu0 %v601
  %v702 = vpop.f32.mrf.mxu0
  %v703 = vadd.f32 %v519, %v702
  %v704 = vpop.f32.mrf.mxu0
  %v705 = vadd.f32 %v519, %v704
  %706 = vdwg.mxu0
  %v707 = vtanh.pop %v613
  %v708 = vtanh.pop %v615
  %v709 = vtanh.pop %v618
  %v710 = vtanh.pop %v620
  %v711 = vtanh.pop %v623
  %v712 = vtanh.pop %v625
  %v713 = vtanh.pop %v628
  %v714 = vtanh.pop %v630
  %v715 = vtanh.pop %v633
  %v716 = vtanh.pop %v635
  %v717 = vtanh.pop %v638
  %v718 = vtanh.pop %v640
  %v719 = vtanh.pop %v643
  %v720 = vtanh.pop %v645
  %v721 = vtanh.pop %v648
  %v722 = vtanh.pop %v650
  %v723 = vtanh.pop %v653
  %v724 = vtanh.pop %v655
  %v725 = vtanh.pop %v658
  %v726 = vtanh.pop %v660
  %v727 = vtanh.pop %v663
  %v728 = vtanh.pop %v665
  %v729 = vtanh.pop %v668
  %v730 = vtanh.pop %v670
  %v731 = vtanh.pop %v673
  %v732 = vtanh.pop %v675
  %v733 = vtanh.pop %v678
  %v734 = vtanh.pop %v680
  %v735 = vtanh.pop %v683
  %v736 = vtanh.pop %v685
  %v737 = vtanh.pop %v688
  %v738 = vtanh.pop %v690
  %v739 = vtanh.pop %v693
  %v740 = vtanh.pop %v695
  %v741 = vtanh.pop %v698
  %v742 = vtanh.pop %v700
  %v743 = vtanh.pop %v703
  %v744 = vtanh.pop %v705
  %v745 = vpack.c.bf16 %v708, %v707
  %v746 = vpack.c.bf16 %v710, %v709
  %v747 = vpack.c.bf16 %v712, %v711
  %v748 = vpack.c.bf16 %v714, %v713
  %v749 = vpack.c.bf16 %v716, %v715
  %v750 = vpack.c.bf16 %v718, %v717
  %v751 = vpack.c.bf16 %v720, %v719
  %v752 = vpack.c.bf16 %v722, %v721
  %v753 = vpack.c.bf16 %v724, %v723
  %v754 = vpack.c.bf16 %v726, %v725
  %v755 = vpack.c.bf16 %v728, %v727
  %v756 = vpack.c.bf16 %v730, %v729
  %v757 = vpack.c.bf16 %v732, %v731
  %v758 = vpack.c.bf16 %v734, %v733
  %v759 = vpack.c.bf16 %v736, %v735
  %v760 = vpack.c.bf16 %v738, %v737
  %v761 = vpack.c.bf16 %v740, %v739
  %v762 = vpack.c.bf16 %v742, %v741
  %v763 = vpack.c.bf16 %v744, %v743
  %v764 = vld [vmem:[%s5] sm:$0xf]
  %v765 = vld [vmem:[%s5 + $0x4] sm:$0xf]
  %v766 = vld [vmem:[%s5 + $0x8] sm:$0xf]
  %v767 = vld [vmem:[%s5 + $0xc] sm:$0xf]
  %v768 = vld [vmem:[%s5 + $0x10] sm:$0xf]
  %v769 = vld [vmem:[%s5 + $0x14] sm:$0xf]
  %v770 = vld [vmem:[%s5 + $0x18] sm:$0xf]
  %v771 = vld [vmem:[%s5 + $0x1c] sm:$0xf]
  %v772 = vld [vmem:[%s6] sm:$0x1]
  %v774 = vperm.slane %v772, 0
  %v784 = vunpack.c.l.b16 %v764
  %v785 = vunpack.c.l.b16 %v765
  %v786 = vunpack.c.l.b16 %v766
  %v787 = vunpack.c.l.b16 %v767
  %v788 = vunpack.c.l.b16 %v768
  %v789 = vunpack.c.l.b16 %v769
  %v790 = vunpack.c.l.b16 %v770
  %v791 = vunpack.c.l.b16 %v771
  %v792 = vpack.c.b16 %v785, %v784
  %v793 = vpack.c.b16 %v787, %v786
  %v794 = vpack.c.b16 %v789, %v788
  %v795 = vpack.c.b16 %v791, %v790
  %v801 = vsel %vm545, %v745, 0
  %v804 = vsel %vm545, %v746, 0
  %v807 = vsel %vm545, %v747, 0
  %v810 = vsel %vm545, %v748, 0
  %v813 = vsel %vm545, %v749, 0
  %v816 = vsel %vm545, %v750, 0
  %v819 = vsel %vm545, %v751, 0
  %v822 = vsel %vm545, %v752, 0
  %v825 = vsel %vm545, %v753, 0
  %v828 = vsel %vm545, %v754, 0
  %v831 = vsel %vm545, %v755, 0
  %v834 = vsel %vm545, %v756, 0
  %v837 = vsel %vm545, %v757, 0
  %v840 = vsel %vm545, %v758, 0
  %v843 = vsel %vm545, %v759, 0
  %v846 = vsel %vm545, %v760, 0
  %v849 = vsel %vm545, %v761, 0
  %v852 = vsel %vm545, %v762, 0
  %v855 = vsel %vm545, %v763, 0
  %857 = vmatpush.bf16.msra.mxu0 0
  %858 = vmatpush.bf16.msra.mxu0 0
  %859 = vmatpush.bf16.msra.mxu0 0
  %860 = vmatpush.bf16.msra.mxu0 0
  %861 = vmatpush.bf16.msra.mxu0 %v795
  %862 = vmatpush.bf16.msra.mxu0 %v794
  %863 = vmatpush.bf16.msra.mxu0 %v793
  %864 = vmatpush.bf16.msra.mxu0 %v792
  %865 = vmatmul.bf16.gmra.mxu0 %v801
  %v866 = vpop.f32.mrf.mxu0
  %v867 = vadd.f32 %v774, %v866
  %v868 = vpop.f32.mrf.mxu0
  %v869 = vadd.f32 %v774, %v868
  %870 = vmatmul.bf16.gmra.mxu0 %v804
  %v871 = vpop.f32.mrf.mxu0
  %v872 = vadd.f32 %v774, %v871
  %v873 = vpop.f32.mrf.mxu0
  %v874 = vadd.f32 %v774, %v873
  %875 = vmatmul.bf16.gmra.mxu0 %v807
  %v876 = vpop.f32.mrf.mxu0
  %v877 = vadd.f32 %v774, %v876
  %v878 = vpop.f32.mrf.mxu0
  %v879 = vadd.f32 %v774, %v878
  %880 = vmatmul.bf16.gmra.mxu0 %v810
  %v881 = vpop.f32.mrf.mxu0
  %v882 = vadd.f32 %v774, %v881
  %v883 = vpop.f32.mrf.mxu0
  %v884 = vadd.f32 %v774, %v883
  %885 = vmatmul.bf16.gmra.mxu0 %v813
  %v886 = vpop.f32.mrf.mxu0
  %v887 = vadd.f32 %v774, %v886
  %v888 = vpop.f32.mrf.mxu0
  %v889 = vadd.f32 %v774, %v888
  %890 = vmatmul.bf16.gmra.mxu0 %v816
  %v891 = vpop.f32.mrf.mxu0
  %v892 = vadd.f32 %v774, %v891
  %v893 = vpop.f32.mrf.mxu0
  %v894 = vadd.f32 %v774, %v893
  %895 = vmatmul.bf16.gmra.mxu0 %v819
  %v896 = vpop.f32.mrf.mxu0
  %v897 = vadd.f32 %v774, %v896
  %v898 = vpop.f32.mrf.mxu0
  %v899 = vadd.f32 %v774, %v898
  %900 = vmatmul.bf16.gmra.mxu0 %v822
  %v901 = vpop.f32.mrf.mxu0
  %v902 = vadd.f32 %v774, %v901
  %v903 = vpop.f32.mrf.mxu0
  %v904 = vadd.f32 %v774, %v903
  %905 = vmatmul.bf16.gmra.mxu0 %v825
  %v906 = vpop.f32.mrf.mxu0
  %v907 = vadd.f32 %v774, %v906
  %v908 = vpop.f32.mrf.mxu0
  %v909 = vadd.f32 %v774, %v908
  %910 = vmatmul.bf16.gmra.mxu0 %v828
  %v911 = vpop.f32.mrf.mxu0
  %v912 = vadd.f32 %v774, %v911
  %v913 = vpop.f32.mrf.mxu0
  %v914 = vadd.f32 %v774, %v913
  %915 = vmatmul.bf16.gmra.mxu0 %v831
  %v916 = vpop.f32.mrf.mxu0
  %v917 = vadd.f32 %v774, %v916
  %v918 = vpop.f32.mrf.mxu0
  %v919 = vadd.f32 %v774, %v918
  %920 = vmatmul.bf16.gmra.mxu0 %v834
  %v921 = vpop.f32.mrf.mxu0
  %v922 = vadd.f32 %v774, %v921
  %v923 = vpop.f32.mrf.mxu0
  %v924 = vadd.f32 %v774, %v923
  %925 = vmatmul.bf16.gmra.mxu0 %v837
  %v926 = vpop.f32.mrf.mxu0
  %v927 = vadd.f32 %v774, %v926
  %v928 = vpop.f32.mrf.mxu0
  %v929 = vadd.f32 %v774, %v928
  %930 = vmatmul.bf16.gmra.mxu0 %v840
  %v931 = vpop.f32.mrf.mxu0
  %v932 = vadd.f32 %v774, %v931
  %v933 = vpop.f32.mrf.mxu0
  %v934 = vadd.f32 %v774, %v933
  %935 = vmatmul.bf16.gmra.mxu0 %v843
  %v936 = vpop.f32.mrf.mxu0
  %v937 = vadd.f32 %v774, %v936
  %v938 = vpop.f32.mrf.mxu0
  %v939 = vadd.f32 %v774, %v938
  %940 = vmatmul.bf16.gmra.mxu0 %v846
  %v941 = vpop.f32.mrf.mxu0
  %v942 = vadd.f32 %v774, %v941
  %v943 = vpop.f32.mrf.mxu0
  %v944 = vadd.f32 %v774, %v943
  %945 = vmatmul.bf16.gmra.mxu0 %v849
  %v946 = vpop.f32.mrf.mxu0
  %v947 = vadd.f32 %v774, %v946
  %v948 = vpop.f32.mrf.mxu0
  %v949 = vadd.f32 %v774, %v948
  %950 = vmatmul.bf16.gmra.mxu0 %v852
  %v951 = vpop.f32.mrf.mxu0
  %v952 = vadd.f32 %v774, %v951
  %v953 = vpop.f32.mrf.mxu0
  %v954 = vadd.f32 %v774, %v953
  %955 = vmatmul.bf16.gmra.mxu0 %v855
  %v956 = vpop.f32.mrf.mxu0
  %v957 = vadd.f32 %v774, %v956
  %v958 = vpop.f32.mrf.mxu0
  %v959 = vadd.f32 %v774, %v958
  %960 = vdwg.mxu0
  %v961 = vadd.f32 %v358, %v867
  %v962 = vadd.f32 %v360, %v869
  %v963 = vadd.f32 %v363, %v872
  %v964 = vadd.f32 %v365, %v874
  %v965 = vadd.f32 %v368, %v877
  %v966 = vadd.f32 %v370, %v879
  %v967 = vadd.f32 %v373, %v882
  %v968 = vadd.f32 %v375, %v884
  %v969 = vadd.f32 %v378, %v887
  %v970 = vadd.f32 %v380, %v889
  %v971 = vadd.f32 %v383, %v892
  %v972 = vadd.f32 %v385, %v894
  %v973 = vadd.f32 %v388, %v897
  %v974 = vadd.f32 %v390, %v899
  %v975 = vadd.f32 %v393, %v902
  %v976 = vadd.f32 %v395, %v904
  %v977 = vadd.f32 %v398, %v907
  %v978 = vadd.f32 %v400, %v909
  %v979 = vadd.f32 %v403, %v912
  %v980 = vadd.f32 %v405, %v914
  %v981 = vadd.f32 %v408, %v917
  %v982 = vadd.f32 %v410, %v919
  %v983 = vadd.f32 %v413, %v922
  %v984 = vadd.f32 %v415, %v924
  %v985 = vadd.f32 %v418, %v927
  %v986 = vadd.f32 %v420, %v929
  %v987 = vadd.f32 %v423, %v932
  %v988 = vadd.f32 %v425, %v934
  %v989 = vadd.f32 %v428, %v937
  %v990 = vadd.f32 %v430, %v939
  %v991 = vadd.f32 %v433, %v942
  %v992 = vadd.f32 %v435, %v944
  %v993 = vadd.f32 %v438, %v947
  %v994 = vadd.f32 %v440, %v949
  %v995 = vadd.f32 %v443, %v952
  %v996 = vadd.f32 %v445, %v954
  %v997 = vadd.f32 %v448, %v957
  %v998 = vadd.f32 %v450, %v959
  %vm999 = vcmask 15360
  %1000 = vst.msk [vmem:[%s7] sm:$0xff] %vm999, %v961
  %1001 = vst.msk [vmem:[%s7 + $0x8] sm:$0xff] %vm999, %v962
  %1002 = vst.msk [vmem:[%s7 + $0x10] sm:$0xff] %vm999, %v963
  %1003 = vst.msk [vmem:[%s7 + $0x18] sm:$0xff] %vm999, %v964
  %1004 = vst.msk [vmem:[%s7 + $0x20] sm:$0xff] %vm999, %v965
  %1005 = vst.msk [vmem:[%s7 + $0x28] sm:$0xff] %vm999, %v966
  %1006 = vst.msk [vmem:[%s7 + $0x30] sm:$0xff] %vm999, %v967
  %1007 = vst.msk [vmem:[%s7 + $0x38] sm:$0xff] %vm999, %v968
  %1008 = vst.msk [vmem:[%s7 + $0x40] sm:$0xff] %vm999, %v969
  %1009 = vst.msk [vmem:[%s7 + $0x48] sm:$0xff] %vm999, %v970
  %1010 = vst.msk [vmem:[%s7 + $0x50] sm:$0xff] %vm999, %v971
  %1011 = vst.msk [vmem:[%s7 + $0x58] sm:$0xff] %vm999, %v972
  %1012 = vst.msk [vmem:[%s7 + $0x60] sm:$0xff] %vm999, %v973
  %1013 = vst.msk [vmem:[%s7 + $0x68] sm:$0xff] %vm999, %v974
  %1014 = vst.msk [vmem:[%s7 + $0x70] sm:$0xff] %vm999, %v975
  %1015 = vst.msk [vmem:[%s7 + $0x78] sm:$0xff] %vm999, %v976
  %1016 = vst.msk [vmem:[%s7 + $0x80] sm:$0xff] %vm999, %v977
  %1017 = vst.msk [vmem:[%s7 + $0x88] sm:$0xff] %vm999, %v978
  %1018 = vst.msk [vmem:[%s7 + $0x90] sm:$0xff] %vm999, %v979
  %1019 = vst.msk [vmem:[%s7 + $0x98] sm:$0xff] %vm999, %v980
  %1020 = vst.msk [vmem:[%s7 + $0xa0] sm:$0xff] %vm999, %v981
  %1021 = vst.msk [vmem:[%s7 + $0xa8] sm:$0xff] %vm999, %v982
  %1022 = vst.msk [vmem:[%s7 + $0xb0] sm:$0xff] %vm999, %v983
  %1023 = vst.msk [vmem:[%s7 + $0xb8] sm:$0xff] %vm999, %v984
  %1024 = vst.msk [vmem:[%s7 + $0xc0] sm:$0xff] %vm999, %v985
  %1025 = vst.msk [vmem:[%s7 + $0xc8] sm:$0xff] %vm999, %v986
  %1026 = vst.msk [vmem:[%s7 + $0xd0] sm:$0xff] %vm999, %v987
  %1027 = vst.msk [vmem:[%s7 + $0xd8] sm:$0xff] %vm999, %v988
  %1028 = vst.msk [vmem:[%s7 + $0xe0] sm:$0xff] %vm999, %v989
  %1029 = vst.msk [vmem:[%s7 + $0xe8] sm:$0xff] %vm999, %v990
  %1030 = vst.msk [vmem:[%s7 + $0xf0] sm:$0xff] %vm999, %v991
  %1031 = vst.msk [vmem:[%s7 + $0xf8] sm:$0xff] %vm999, %v992
  %1032 = vst.msk [vmem:[%s7 + $0x100] sm:$0xff] %vm999, %v993
  %1033 = vst.msk [vmem:[%s7 + $0x108] sm:$0xff] %vm999, %v994
  %1034 = vst.msk [vmem:[%s7 + $0x110] sm:$0xff] %vm999, %v995
  %1035 = vst.msk [vmem:[%s7 + $0x118] sm:$0xff] %vm999, %v996
  %1036 = vst.msk [vmem:[%s7 + $0x120] sm:$0xff] %vm999, %v997
  %1037 = vst.msk [vmem:[%s7 + $0x128] sm:$0xff] %vm999, %v998
  // Predicated region
  $region30: #{tpu_custom_call.1} parent=0 // pred_check
    _
  $region31: #{tpu_custom_call.1} parent=0 // pred_check_branch
    %1039 = sbr.rel (0) target = $region33
  $region32: #{tpu_custom_call.1} parent=0 // pred_region
    _
  $region33: #{tpu_custom_call.1} parent=0 // pred_fallthru
    _
  // Predicated region
  $region34: #{tpu_custom_call.1} parent=0 // pred_check
    _
  $region35: #{tpu_custom_call.1} parent=0 // pred_check_branch
    %1041 = sbr.rel (0) target = $region37
  $region36: #{tpu_custom_call.1} parent=0 // pred_region
    _
  $region37: #{tpu_custom_call.1} parent=0 // pred_fallthru
    _

</llo_original>
